<compile_context>
chip_gen: v7x
topology: tpu7x:2x2x1
jax: 0.10.0
libtpu: 0.0.40
codegen_flags: <defaults>
</compile_context>

<pallas_src>
import functools

import jax
import jax.numpy as jnp
from jax.experimental import pallas as pl
from jax.experimental.pallas import tpu as pltpu

LANE = 128      # TPU lane width (fast vreg axis)
SUBLANE = 8     # TPU sublane count


def _round_up(v, m):
    return ((v + m - 1) // m) * m


# ----------------------------- Pallas kernel ------------------------------- #

def _fused_gnn_kernel(a_ref, p_ref, slab_ref, o_ref, *, n, f, h, offs):
    """Whole forward pass in one kernel; intermediates stay in VMEM/vregs.

    slab_ref packs (static row offsets in `offs`, all multiples of 8):
      X (n,f) | W1 (f,h) | b1 (1,h) | W2 (h,h) | b2 (1,h) |
      W_out lane-padded (h,128) | b_out replicated (1,128)
    """
    r_x, r_w1, r_b1, r_w2, r_b2, r_wout, r_bout = offs

    a = a_ref[...]                                      # (n, n), loaded once
    x = slab_ref[r_x:r_x + n, 0:f]                      # (n, f)
    w1 = slab_ref[r_w1:r_w1 + f, 0:h]                   # (f, h)
    b1 = slab_ref[r_b1:r_b1 + 1, 0:h]                   # (1, h)
    w2 = slab_ref[r_w2:r_w2 + h, 0:h]                   # (h, h)
    b2 = slab_ref[r_b2:r_b2 + 1, 0:h]                   # (1, h)
    w_out = slab_ref[r_wout:r_wout + h, :]              # (h, 128), col 0 live
    b_out = slab_ref[r_bout:r_bout + 1, :]              # (1, 128)

    # ---- GCN layer 1: F < HIDDEN  ->  aggregate first: (A @ X) @ W1 ----
    ax = jnp.dot(a, x, preferred_element_type=jnp.float32)
    h1 = jnp.maximum(
        jnp.dot(ax, w1, preferred_element_type=jnp.float32) + b1, 0.0)

    # ---- GCN layer 2: square weight -> transform first: A @ (h1 @ W2) ----
    h1w = jnp.dot(h1, w2, preferred_element_type=jnp.float32)
    h2 = jnp.maximum(
        jnp.dot(a, h1w, preferred_element_type=jnp.float32) + b2, 0.0)

    # ---- global mean pool (P @ h2) + output Linear, lane-dense store ----
    pooled = jnp.dot(p_ref[...], h2, preferred_element_type=jnp.float32)
    o_ref[...] = (
        jnp.dot(pooled, w_out, preferred_element_type=jnp.float32) + b_out)


# ------------------------------ JAX glue ----------------------------------- #

def build_norm_adj(edge_index, num_nodes):
    """Dense GCN-normalized adjacency: D^{-1/2}(A + I)D^{-1/2}."""
    src, dst = edge_index[0], edge_index[1]
    a = jnp.zeros((num_nodes, num_nodes), jnp.float32)
    a = a.at[dst, src].add(1.0)                         # a[i, j] = #edges j -> i
    a = a + jnp.eye(num_nodes, dtype=jnp.float32)       # self-loops
    deg = a.sum(axis=1)
    d_inv_sqrt = jnp.where(deg > 0, jax.lax.rsqrt(deg), 0.0)
    return d_inv_sqrt[:, None] * a * d_inv_sqrt[None, :]
    # TODO(synk): for large N, replace this dense O(N^2) A_hat with a
    # gather-based message pass via PrefetchScalarGridSpec (O(E*H)).


def build_mean_pool_matrix(batch, num_graphs):
    """P[g, i] = 1/|graph g| if node i belongs to graph g else 0."""
    oh = (batch[None, :] == jnp.arange(num_graphs)[:, None]).astype(jnp.float32)
    counts = jnp.maximum(oh.sum(axis=1, keepdims=True), 1.0)
    return oh / counts


def pack_operand_slab(x, params, hidden):
    """Pack X + all parameters into one lane-dense (rows, 128) f32 slab."""
    n, f = x.shape
    h = hidden
    r_x = 0
    r_w1 = _round_up(r_x + n, SUBLANE)
    r_b1 = _round_up(r_w1 + f, SUBLANE)
    r_w2 = _round_up(r_b1 + 1, SUBLANE)
    r_b2 = _round_up(r_w2 + h, SUBLANE)
    r_wout = _round_up(r_b2 + 1, SUBLANE)
    r_bout = _round_up(r_wout + h, SUBLANE)
    rows = _round_up(r_bout + 1, SUBLANE)

    slab = jnp.zeros((rows, LANE), jnp.float32)
    slab = slab.at[r_x:r_x + n, :f].set(x.astype(jnp.float32))
    slab = slab.at[r_w1:r_w1 + f, :h].set(params["w1"].astype(jnp.float32))
    slab = slab.at[r_b1, :h].set(params["b1"].astype(jnp.float32))
    slab = slab.at[r_w2:r_w2 + h, :h].set(params["w2"].astype(jnp.float32))
    slab = slab.at[r_b2, :h].set(params["b2"].astype(jnp.float32))
    slab = slab.at[r_wout:r_wout + h, 0].set(
        params["w_out"].reshape(h).astype(jnp.float32))
    slab = slab.at[r_bout, :].set(params["b_out"].reshape(()).astype(jnp.float32))
    offs = (r_x, r_w1, r_b1, r_w2, r_b2, r_wout, r_bout)
    return slab, offs


def simple_gnn_forward(x, edge_index, batch, num_graphs, params):
    n, f = x.shape
    h = params["w1"].shape[1]

    a_hat = build_norm_adj(edge_index, n)

    # Pad pooling matrix rows up to a sublane multiple (zero rows contribute 0).
    g_pad = max(SUBLANE, _round_up(num_graphs, SUBLANE))
    p = build_mean_pool_matrix(batch, num_graphs)
    p_pad = jnp.zeros((g_pad, n), jnp.float32).at[:num_graphs, :].set(p)

    slab, offs = pack_operand_slab(x, params, h)

    kernel = functools.partial(_fused_gnn_kernel, n=n, f=f, h=h, offs=offs)

    flops = 2 * (n * n * f + n * f * h        # layer 1
                 + n * h * h + n * n * h      # layer 2
                 + g_pad * n * h              # pooling
                 + g_pad * h * LANE)          # output linear (lane-padded)
    bytes_accessed = 4 * (a_hat.size + p_pad.size + slab.size + g_pad * LANE)

    # No grid + memory_space-only BlockSpecs: every operand is DMA'd into VMEM
    # exactly once, single-buffered (3 descriptors total instead of 9).
    out_padded = pl.pallas_call(
        kernel,
        out_shape=jax.ShapeDtypeStruct((g_pad, LANE), jnp.float32),
        in_specs=[
            pl.BlockSpec(memory_space=pltpu.MemorySpace.VMEM),   # A_hat
            pl.BlockSpec(memory_space=pltpu.MemorySpace.VMEM),   # P (padded)
            pl.BlockSpec(memory_space=pltpu.MemorySpace.VMEM),   # packed slab
        ],
        out_specs=pl.BlockSpec(memory_space=pltpu.MemorySpace.VMEM),
        cost_estimate=pl.CostEstimate(
            flops=int(flops), transcendentals=0,
            bytes_accessed=int(bytes_accessed)),
    )(a_hat, p_pad, slab)

    # Slice the lane-dense slab back to the logical (num_graphs, 1) result.
    # (Padded rows contain b_out; they are never consumed.)
    return out_padded[:num_graphs, :1]


def simple_gnn_reference(x, edge_index, batch, num_graphs, params):
    a_hat = build_norm_adj(edge_index, x.shape[0])
    p = build_mean_pool_matrix(batch, num_graphs)
    h1 = jnp.maximum(a_hat @ (x @ params["w1"]) + params["b1"], 0.0)
    h2 = jnp.maximum(a_hat @ (h1 @ params["w2"]) + params["b2"], 0.0)
    return (p @ h2) @ params["w_out"] + params["b_out"]


# ------------------------------- main --------------------------------------- #

if __name__ == "__main__":
    NUM_NODES = 16
    NUM_FEATURES = 8
    HIDDEN = 32
    NUM_GRAPHS = 2
    NODES_PER_GRAPH = NUM_NODES // NUM_GRAPHS

    key = jax.random.PRNGKey(0)
    kx, k1, k2, k3, kb1, kb2, kb3 = jax.random.split(key, 7)

    # Node features.
    x = jax.random.normal(kx, (NUM_NODES, NUM_FEATURES), dtype=jnp.float32)

    # Two disjoint 8-node undirected rings (both edge directions), 32 edges.
    srcs, dsts = [], []
    for g in range(NUM_GRAPHS):
        off = g * NODES_PER_GRAPH
        s = jnp.arange(NODES_PER_GRAPH, dtype=jnp.int32) + off
        d = (jnp.arange(NODES_PER_GRAPH, dtype=jnp.int32) + 1) % NODES_PER_GRAPH + off
        srcs += [s, d]
        dsts += [d, s]
    edge_index = jnp.stack(
        [jnp.concatenate(srcs), jnp.concatenate(dsts)], axis=0)

    # Graph assignment: 8 nodes per graph.
    batch = jnp.repeat(jnp.arange(NUM_GRAPHS, dtype=jnp.int32), NODES_PER_GRAPH)

    # Deterministic parameter init (shapes from SimpleGNN.__init__).
    params = {
        "w1": 0.1 * jax.random.normal(k1, (NUM_FEATURES, HIDDEN), jnp.float32),
        "b1": 0.1 * jax.random.normal(kb1, (HIDDEN,), jnp.float32),
        "w2": 0.1 * jax.random.normal(k2, (HIDDEN, HIDDEN), jnp.float32),
        "b2": 0.1 * jax.random.normal(kb2, (HIDDEN,), jnp.float32),
        "w_out": 0.1 * jax.random.normal(k3, (HIDDEN, 1), jnp.float32),
        "b_out": 0.1 * jax.random.normal(kb3, (1,), jnp.float32),
    }

    out = simple_gnn_forward(x, edge_index, batch, NUM_GRAPHS, params)
    out = jax.block_until_ready(out)

    ref = simple_gnn_reference(x, edge_index, batch, NUM_GRAPHS, params)
    assert out.shape == (NUM_GRAPHS, 1)
    assert jnp.allclose(out, ref, atol=1e-5, rtol=1e-5)

    print("KERNEL_OK")
</pallas_src>

<mosaic_0001>
module attributes {stable_mosaic.version = 11 : i64} {
  func.func @_fused_gnn_kernel(%arg0: memref<16x16xf32, #tpu.memory_space<vmem>>, %arg1: memref<8x16xf32, #tpu.memory_space<vmem>>, %arg2: memref<112x128xf32, #tpu.memory_space<vmem>>, %arg3: memref<8x128xf32, #tpu.memory_space<vmem>>) attributes {dimension_semantics = [], scalar_prefetch = 0 : i64, scratch_operands = 0 : i64, tpu.core_type = #tpu.core_type<tc>} {
    %c0 = arith.constant 0 : index
    %c0_0 = arith.constant 0 : index
    %0 = vector.load %arg0[%c0, %c0_0] : memref<16x16xf32, #tpu.memory_space<vmem>>, vector<16x16xf32>
    %c0_1 = arith.constant 0 : index
    %c0_2 = arith.constant 0 : index
    %1 = vector.load %arg2[%c0_1, %c0_2] : memref<112x128xf32, #tpu.memory_space<vmem>>, vector<16x8xf32>
    %c16 = arith.constant 16 : index
    %c0_3 = arith.constant 0 : index
    %2 = vector.load %arg2[%c16, %c0_3] : memref<112x128xf32, #tpu.memory_space<vmem>>, vector<8x32xf32>
    %c24 = arith.constant 24 : index
    %c0_4 = arith.constant 0 : index
    %3 = vector.load %arg2[%c24, %c0_4] : memref<112x128xf32, #tpu.memory_space<vmem>>, vector<1x32xf32>
    %c32 = arith.constant 32 : index
    %c0_5 = arith.constant 0 : index
    %4 = vector.load %arg2[%c32, %c0_5] : memref<112x128xf32, #tpu.memory_space<vmem>>, vector<32x32xf32>
    %c64 = arith.constant 64 : index
    %c0_6 = arith.constant 0 : index
    %5 = vector.load %arg2[%c64, %c0_6] : memref<112x128xf32, #tpu.memory_space<vmem>>, vector<1x32xf32>
    %c72 = arith.constant 72 : index
    %c0_7 = arith.constant 0 : index
    %6 = vector.load %arg2[%c72, %c0_7] : memref<112x128xf32, #tpu.memory_space<vmem>>, vector<32x128xf32>
    %c104 = arith.constant 104 : index
    %c0_8 = arith.constant 0 : index
    %7 = vector.load %arg2[%c104, %c0_8] : memref<112x128xf32, #tpu.memory_space<vmem>>, vector<1x128xf32>
    %cst = arith.constant dense<0.000000e+00> : vector<16x8xf32>
    %8 = tpu.matmul %0, %1, %cst {dimension_numbers = #tpu.dot_dimension_numbers<[1], [0], [0], [1], [0, 0, 1, 1], [], []>} : vector<16x16xf32>, vector<16x8xf32>, vector<16x8xf32> -> vector<16x8xf32>
    %cst_9 = arith.constant dense<0.000000e+00> : vector<16x32xf32>
    %9 = tpu.matmul %8, %2, %cst_9 {dimension_numbers = #tpu.dot_dimension_numbers<[1], [0], [0], [1], [0, 0, 1, 1], [], []>} : vector<16x8xf32>, vector<8x32xf32>, vector<16x32xf32> -> vector<16x32xf32>
    %10 = vector.broadcast %3 : vector<1x32xf32> to vector<16x32xf32>
    %11 = arith.addf %9, %10 : vector<16x32xf32>
    %cst_10 = arith.constant 0.000000e+00 : f32
    %12 = vector.broadcast %cst_10 : f32 to vector<16x32xf32>
    %13 = arith.maximumf %11, %12 : vector<16x32xf32>
    %cst_11 = arith.constant dense<0.000000e+00> : vector<16x32xf32>
    %14 = tpu.matmul %13, %4, %cst_11 {dimension_numbers = #tpu.dot_dimension_numbers<[1], [0], [0], [1], [0, 0, 1, 1], [], []>} : vector<16x32xf32>, vector<32x32xf32>, vector<16x32xf32> -> vector<16x32xf32>
    %cst_12 = arith.constant dense<0.000000e+00> : vector<16x32xf32>
    %15 = tpu.matmul %0, %14, %cst_12 {dimension_numbers = #tpu.dot_dimension_numbers<[1], [0], [0], [1], [0, 0, 1, 1], [], []>} : vector<16x16xf32>, vector<16x32xf32>, vector<16x32xf32> -> vector<16x32xf32>
    %16 = vector.broadcast %5 : vector<1x32xf32> to vector<16x32xf32>
    %17 = arith.addf %15, %16 : vector<16x32xf32>
    %cst_13 = arith.constant 0.000000e+00 : f32
    %18 = vector.broadcast %cst_13 : f32 to vector<16x32xf32>
    %19 = arith.maximumf %17, %18 : vector<16x32xf32>
    %c0_14 = arith.constant 0 : index
    %c0_15 = arith.constant 0 : index
    %20 = vector.load %arg1[%c0_14, %c0_15] : memref<8x16xf32, #tpu.memory_space<vmem>>, vector<8x16xf32>
    %cst_16 = arith.constant dense<0.000000e+00> : vector<8x32xf32>
    %21 = tpu.matmul %20, %19, %cst_16 {dimension_numbers = #tpu.dot_dimension_numbers<[1], [0], [0], [1], [0, 0, 1, 1], [], []>} : vector<8x16xf32>, vector<16x32xf32>, vector<8x32xf32> -> vector<8x32xf32>
    %cst_17 = arith.constant dense<0.000000e+00> : vector<8x128xf32>
    %22 = tpu.matmul %21, %6, %cst_17 {dimension_numbers = #tpu.dot_dimension_numbers<[1], [0], [0], [1], [0, 0, 1, 1], [], []>} : vector<8x32xf32>, vector<32x128xf32>, vector<8x128xf32> -> vector<8x128xf32>
    %23 = vector.broadcast %7 : vector<1x128xf32> to vector<8x128xf32>
    %24 = arith.addf %22, %23 : vector<8x128xf32>
    %c0_18 = arith.constant 0 : index
    %c0_19 = arith.constant 0 : index
    %25 = vector.load %arg3[%c0_18, %c0_19] : memref<8x128xf32, #tpu.memory_space<vmem>>, vector<8x128xf32>
    tpu.vector_store %arg3[%c0_18, %c0_19], %24 {strides = array<i32>} : memref<8x128xf32, #tpu.memory_space<vmem>>, vector<8x128xf32>,
    return
  }
}

</mosaic_0001>

<llo_original>
// kernel: tpu_custom_call.1
$region0: #{tpu_custom_call.1}
  #allocation0 [shape = 'u32[]', space=smem, size = 0x4, offset = 0x4, fixed_abs, tag = 'smem constant byte address 0x4 - core index']
  #allocation1 [shape = 'u32[144,128]{1,0:T(1,128)}', space=vmem, size = 0x12000, scoped, tag = 'internal scratch']
  %s0 = inlined_call_operand.hbm [shape: f32[16,16], index: 0, kind: input, shape index: {}]
  %s1 = inlined_call_operand.hbm [shape: f32[8,16], index: 1, kind: input, shape index: {}]
  %s2 = inlined_call_operand.hbm [shape: f32[112,128], index: 2, kind: input, shape index: {}]
  %s3 = inlined_call_operand.hbm [shape: f32[8,128], index: 3, kind: output, shape index: {}]
  %s4 = sld [smem:[#allocation0]]
  $region34: #{tpu_custom_call.1} parent=0
    _
  %s6 = ssub.s32 1, %s4
  %s7 = scalar_select 0, %s6, %s4
  $region1: #{tpu_custom_call.1} parent=0
    #allocation2 [shape = 'u8[8192]{0}', space=vmem, size = 0x2000, scoped, tag = 'input window, operand 0, single buffered']
    #allocation3 [shape = 's32[1]{0}', space=sflag, size = 0x4, scoped, tag = 'scoped memory for tpu_custom_call.1']
    #allocation4 [shape = 's32[1]{0}', space=sflag, size = 0x4, scoped, tag = 'scoped memory for tpu_custom_call.1']
    #allocation5 [shape = 'u8[4096]{0}', space=vmem, size = 0x1000, scoped, tag = 'input window, operand 1, single buffered']
    #allocation6 [shape = 's32[1]{0}', space=sflag, size = 0x4, scoped, tag = 'scoped memory for tpu_custom_call.1']
    #allocation7 [shape = 'u8[57344]{0}', space=vmem, size = 0xe000, scoped, tag = 'input window, operand 2, single buffered']
    #allocation8 [shape = 'u8[4096]{0}', space=vmem, size = 0x1000, scoped, tag = 'output window, operand 0, single buffered']
    %8 = vsyncpa [#allocation3], 0
    %9 = vsyncpa [#allocation6], 0
    %10 = vsyncpa [#allocation4], 0
    // Predicated region
    $region2: #{tpu_custom_call.1} parent=1 // pred_check
      _
    $region3: #{tpu_custom_call.1} parent=1 // pred_check_branch
      %12 = sbr.rel (0) target = $region5
    $region4: #{tpu_custom_call.1} parent=1 // pred_region
      %s14 = ssub.s32 256, 256
      %15 = vsyncadd [#allocation3], %s14
      %s16 = sshll.u32 [#allocation2], 4
      %s17 = int_to_ptr.vmem [resolvable:$true] %s16
      %22 = dma.hbm_to_vmem [thread:$0]  %s0, 256, %s17, [#allocation3], 128, 128, 8
    $region5: #{tpu_custom_call.1} parent=1 // pred_fallthru
      _
    // Predicated region
    $region6: #{tpu_custom_call.1} parent=1 // pred_check
      _
    $region7: #{tpu_custom_call.1} parent=1 // pred_check_branch
      %24 = sbr.rel (0) target = $region9
    $region8: #{tpu_custom_call.1} parent=1 // pred_region
      %s26 = ssub.s32 128, 128
      %27 = vsyncadd [#allocation6], %s26
      %s29 = sshll.u32 [#allocation5], 4
      %s30 = int_to_ptr.vmem [resolvable:$true] %s29
      %32 = dma.hbm_to_vmem [thread:$0]  %s1, 128, %s30, [#allocation6]
    $region9: #{tpu_custom_call.1} parent=1 // pred_fallthru
      _
    // Predicated region
    $region10: #{tpu_custom_call.1} parent=1 // pred_check
      _
    $region11: #{tpu_custom_call.1} parent=1 // pred_check_branch
      %34 = sbr.rel (0) target = $region13
    $region12: #{tpu_custom_call.1} parent=1 // pred_region
      %s36 = ssub.s32 1792, 1792
      %37 = vsyncadd [#allocation6], %s36
      %s38 = sshll.u32 [#allocation7], 4
      %s39 = int_to_ptr.vmem [resolvable:$true] %s38
      %44 = dma.hbm_to_vmem [thread:$0]  %s2, 1792, %s39, [#allocation6], 128, 128, 8
    $region13: #{tpu_custom_call.1} parent=1 // pred_fallthru
      _
    // Predicated region
    $region14: #{tpu_custom_call.1} parent=1 // pred_check
      _
    $region15: #{tpu_custom_call.1} parent=1 // pred_check_branch
      %46 = sbr.rel (0) target = $region17
    $region16: #{tpu_custom_call.1} parent=1 // pred_region
      %47 = dma.done [#allocation3], 256
    $region17: #{tpu_custom_call.1} parent=1 // pred_fallthru
      _
    // Predicated region
    $region18: #{tpu_custom_call.1} parent=1 // pred_check
      _
    $region19: #{tpu_custom_call.1} parent=1 // pred_check_branch
      %49 = sbr.rel (0) target = $region21
    $region20: #{tpu_custom_call.1} parent=1 // pred_region
      %50 = dma.done [#allocation6], 128
    $region21: #{tpu_custom_call.1} parent=1 // pred_fallthru
      _
    // Predicated region
    $region22: #{tpu_custom_call.1} parent=1 // pred_check
      _
    $region23: #{tpu_custom_call.1} parent=1 // pred_check_branch
      %52 = sbr.rel (0) target = $region25
    $region24: #{tpu_custom_call.1} parent=1 // pred_region
      %53 = dma.done [#allocation6], 1792
    $region25: #{tpu_custom_call.1} parent=1 // pred_fallthru
      _
    %v54 = vld [vmem:[#allocation2] sm:$0xff]
    %v55 = vld [vmem:[#allocation2 + $0x8] sm:$0xff]
    %v56 = vld [vmem:[#allocation7] sm:$0xff]
    %v57 = vld [vmem:[#allocation7 + $0x8] sm:$0xff]
    %v58 = vld [vmem:[#allocation7 + $0x10] sm:$0xff]
    %v59 = vld [vmem:[#allocation7 + $0x18] sm:$0x1]
    %v60 = vld [vmem:[#allocation7 + $0x20] sm:$0xff]
    %v61 = vld [vmem:[#allocation7 + $0x28] sm:$0xff]
    %v62 = vld [vmem:[#allocation7 + $0x30] sm:$0xff]
    %v63 = vld [vmem:[#allocation7 + $0x38] sm:$0xff]
    %v64 = vld [vmem:[#allocation7 + $0x40] sm:$0x1]
    %v65 = vld [vmem:[#allocation7 + $0x48] sm:$0xff]
    %v66 = vld [vmem:[#allocation7 + $0x50] sm:$0xff]
    %v67 = vld [vmem:[#allocation7 + $0x58] sm:$0xff]
    %v68 = vld [vmem:[#allocation7 + $0x60] sm:$0xff]
    %v69 = vld [vmem:[#allocation7 + $0x68] sm:$0x1]
    %vm70 = vcmask 130048
    %v72 = vsel %vm70, %v54, 0
    %v75 = vsel %vm70, %v55, 0
    %77 = vmatprep.subr.mxu0 0.0
    %78 = vmatpush1.msra.mxu0 %v56
    %79 = vmatprep.subr.mxu0 0.0
    %80 = vmatpush1.msra.mxu0 %v57
    %81 = vmatprep.subr.mxu0 0.0
    %82 = vmatpush1.msra.mxu0 0.0
    %83 = vmatprep.subr.mxu0 0.0
    %84 = vmatpush1.msra.mxu0 0.0
    %85 = vmatprep.subr.mxu0 0.0
    %86 = vmatpush1.msra.mxu0 0.0
    %87 = vmatprep.subr.mxu0 0.0
    %88 = vmatpush1.msra.mxu0 0.0
    %89 = vmatprep.subr.mxu0 0.0
    %90 = vmatpush1.msra.mxu0 0.0
    %91 = vmatprep.subr.mxu0 0.0
    %92 = vmatpush1.msra.mxu0 0.0
    %93 = vmatprep.subr.mxu0 0.0
    %94 = vmatpush1.msra.mxu0 0.0
    %95 = vmatprep.subr.mxu0 0.0
    %96 = vmatpush1.msra.mxu0 0.0
    %97 = vmatprep.subr.mxu0 0.0
    %98 = vmatpush1.msra.mxu0 0.0
    %99 = vmatprep.subr.mxu0 0.0
    %100 = vmatpush1.msra.mxu0 0.0
    %101 = vmatprep.subr.mxu0 0.0
    %102 = vmatpush1.msra.mxu0 0.0
    %103 = vmatprep.subr.mxu0 0.0
    %104 = vmatpush1.msra.mxu0 0.0
    %105 = vmatprep.subr.mxu0 0.0
    %106 = vmatpush1.msra.mxu0 0.0
    %107 = vmatprep.subr.mxu0 0.0
    %108 = vmatpush1.msra.mxu0 0.0
    %109 = vmatprep.subr.mxu0 0.0
    %110 = vmatpush1.msra.mxu0 0.0
    %111 = vmatprep.subr.mxu0 0.0
    %112 = vmatpush1.msra.mxu0 0.0
    %113 = vmatprep.subr.mxu0 0.0
    %114 = vmatpush1.msra.mxu0 0.0
    %115 = vmatprep.subr.mxu0 0.0
    %116 = vmatpush1.msra.mxu0 0.0
    %117 = vmatprep.subr.mxu0 0.0
    %118 = vmatpush1.msra.mxu0 0.0
    %119 = vmatprep.subr.mxu0 0.0
    %120 = vmatpush1.msra.mxu0 0.0
    %121 = vmatprep.subr.mxu0 0.0
    %122 = vmatpush1.msra.mxu0 0.0
    %123 = vmatprep.subr.mxu0 0.0
    %124 = vmatpush1.msra.mxu0 0.0
    %125 = vmatprep.subr.mxu0 0.0
    %126 = vmatpush1.msra.mxu0 0.0
    %127 = vmatprep.subr.mxu0 0.0
    %128 = vmatpush1.msra.mxu0 0.0
    %129 = vmatprep.subr.mxu0 0.0
    %130 = vmatpush1.msra.mxu0 0.0
    %131 = vmatprep.subr.mxu0 0.0
    %132 = vmatpush1.msra.mxu0 0.0
    %133 = vmatprep.subr.mxu0 0.0
    %134 = vmatpush1.msra.mxu0 0.0
    %135 = vmatprep.subr.mxu0 0.0
    %136 = vmatpush1.msra.mxu0 0.0
    %137 = vmatprep.subr.mxu0 0.0
    %138 = vmatpush1.msra.mxu0 0.0
    %139 = vmatprep.subr.mxu0 0.0
    %140 = vmatpush1.msra.mxu0 0.0
    %141 = vmatprep.mubr.f32.mxu0 0.0
    %142 = vmatmul.mubr.f32.gmra.mrb[0].mxu0 %v72
    %v143 = vpop.f32.mrb[0].mxu0
    %v144 = vadd.f32 0.0, %v143
    %v145 = vpop.f32.mrb[0].mxu0
    %146 = vmatprep.mubr.f32.mxu0 0.0
    %147 = vmatmul.mubr.f32.gmra.mrb[0].mxu0 %v75
    %v148 = vpop.f32.mrb[0].mxu0
    %v149 = vadd.f32 0.0, %v148
    %v150 = vpop.f32.mrb[0].mxu0
    %151 = vdwg.mxu0
    %v152 = vlaneseq
    %v153 = vshrl.u32 %v152, 7
    %v154 = vsub.s32 0, %v153
    %v155 = vrot.slane %v59, %v154
    %vm156 = vcmask 64512
    %v158 = vsel %vm156, %v144, 0
    %v161 = vsel %vm156, %v149, 0
    %163 = vmatprep.subr.mxu0 0.0
    %164 = vmatpush1.msra.mxu0 %v58
    %165 = vmatprep.subr.mxu0 0.0
    %166 = vmatpush1.msra.mxu0 0.0
    %167 = vmatprep.subr.mxu0 0.0
    %168 = vmatpush1.msra.mxu0 0.0
    %169 = vmatprep.subr.mxu0 0.0
    %170 = vmatpush1.msra.mxu0 0.0
    %171 = vmatprep.subr.mxu0 0.0
    %172 = vmatpush1.msra.mxu0 0.0
    %173 = vmatprep.subr.mxu0 0.0
    %174 = vmatpush1.msra.mxu0 0.0
    %175 = vmatprep.subr.mxu0 0.0
    %176 = vmatpush1.msra.mxu0 0.0
    %177 = vmatprep.subr.mxu0 0.0
    %178 = vmatpush1.msra.mxu0 0.0
    %179 = vmatprep.subr.mxu0 0.0
    %180 = vmatpush1.msra.mxu0 0.0
    %181 = vmatprep.subr.mxu0 0.0
    %182 = vmatpush1.msra.mxu0 0.0
    %183 = vmatprep.subr.mxu0 0.0
    %184 = vmatpush1.msra.mxu0 0.0
    %185 = vmatprep.subr.mxu0 0.0
    %186 = vmatpush1.msra.mxu0 0.0
    %187 = vmatprep.subr.mxu0 0.0
    %188 = vmatpush1.msra.mxu0 0.0
    %189 = vmatprep.subr.mxu0 0.0
    %190 = vmatpush1.msra.mxu0 0.0
    %191 = vmatprep.subr.mxu0 0.0
    %192 = vmatpush1.msra.mxu0 0.0
    %193 = vmatprep.subr.mxu0 0.0
    %194 = vmatpush1.msra.mxu0 0.0
    %195 = vmatprep.subr.mxu0 0.0
    %196 = vmatpush1.msra.mxu0 0.0
    %197 = vmatprep.subr.mxu0 0.0
    %198 = vmatpush1.msra.mxu0 0.0
    %199 = vmatprep.subr.mxu0 0.0
    %200 = vmatpush1.msra.mxu0 0.0
    %201 = vmatprep.subr.mxu0 0.0
    %202 = vmatpush1.msra.mxu0 0.0
    %203 = vmatprep.subr.mxu0 0.0
    %204 = vmatpush1.msra.mxu0 0.0
    %205 = vmatprep.subr.mxu0 0.0
    %206 = vmatpush1.msra.mxu0 0.0
    %207 = vmatprep.subr.mxu0 0.0
    %208 = vmatpush1.msra.mxu0 0.0
    %209 = vmatprep.subr.mxu0 0.0
    %210 = vmatpush1.msra.mxu0 0.0
    %211 = vmatprep.subr.mxu0 0.0
    %212 = vmatpush1.msra.mxu0 0.0
    %213 = vmatprep.subr.mxu0 0.0
    %214 = vmatpush1.msra.mxu0 0.0
    %215 = vmatprep.subr.mxu0 0.0
    %216 = vmatpush1.msra.mxu0 0.0
    %217 = vmatprep.subr.mxu0 0.0
    %218 = vmatpush1.msra.mxu0 0.0
    %219 = vmatprep.subr.mxu0 0.0
    %220 = vmatpush1.msra.mxu0 0.0
    %221 = vmatprep.subr.mxu0 0.0
    %222 = vmatpush1.msra.mxu0 0.0
    %223 = vmatprep.subr.mxu0 0.0
    %224 = vmatpush1.msra.mxu0 0.0
    %225 = vmatprep.subr.mxu0 0.0
    %226 = vmatpush1.msra.mxu0 0.0
    %227 = vmatprep.mubr.f32.mxu0 0.0
    %228 = vmatmul.mubr.f32.gmra.mrb[0].mxu0 %v158
    %v229 = vpop.f32.mrb[0].mxu0
    %v230 = vadd.f32 %v155, %v229
    %v231 = vpop.f32.mrb[0].mxu0
    %232 = vmatprep.mubr.f32.mxu0 0.0
    %233 = vmatmul.mubr.f32.gmra.mrb[0].mxu0 %v161
    %v234 = vpop.f32.mrb[0].mxu0
    %v235 = vadd.f32 %v155, %v234
    %v236 = vpop.f32.mrb[0].mxu0
    %237 = vdwg.mxu0
    %v238 = vmax.f32 %v230, 0.0
    %v239 = vmax.f32 %v235, 0.0
    %vm240 = vcmask 261120
    %v242 = vsel %vm240, %v238, 0
    %v245 = vsel %vm240, %v239, 0
    %247 = vmatprep.subr.mxu0 0.0
    %248 = vmatpush1.msra.mxu0 %v60
    %249 = vmatprep.subr.mxu0 0.0
    %250 = vmatpush1.msra.mxu0 %v61
    %251 = vmatprep.subr.mxu0 0.0
    %252 = vmatpush1.msra.mxu0 %v62
    %253 = vmatprep.subr.mxu0 0.0
    %254 = vmatpush1.msra.mxu0 %v63
    %255 = vmatprep.subr.mxu0 0.0
    %256 = vmatpush1.msra.mxu0 0.0
    %257 = vmatprep.subr.mxu0 0.0
    %258 = vmatpush1.msra.mxu0 0.0
    %259 = vmatprep.subr.mxu0 0.0
    %260 = vmatpush1.msra.mxu0 0.0
    %261 = vmatprep.subr.mxu0 0.0
    %262 = vmatpush1.msra.mxu0 0.0
    %263 = vmatprep.subr.mxu0 0.0
    %264 = vmatpush1.msra.mxu0 0.0
    %265 = vmatprep.subr.mxu0 0.0
    %266 = vmatpush1.msra.mxu0 0.0
    %267 = vmatprep.subr.mxu0 0.0
    %268 = vmatpush1.msra.mxu0 0.0
    %269 = vmatprep.subr.mxu0 0.0
    %270 = vmatpush1.msra.mxu0 0.0
    %271 = vmatprep.subr.mxu0 0.0
    %272 = vmatpush1.msra.mxu0 0.0
    %273 = vmatprep.subr.mxu0 0.0
    %274 = vmatpush1.msra.mxu0 0.0
    %275 = vmatprep.subr.mxu0 0.0
    %276 = vmatpush1.msra.mxu0 0.0
    %277 = vmatprep.subr.mxu0 0.0
    %278 = vmatpush1.msra.mxu0 0.0
    %279 = vmatprep.subr.mxu0 0.0
    %280 = vmatpush1.msra.mxu0 0.0
    %281 = vmatprep.subr.mxu0 0.0
    %282 = vmatpush1.msra.mxu0 0.0
    %283 = vmatprep.subr.mxu0 0.0
    %284 = vmatpush1.msra.mxu0 0.0
    %285 = vmatprep.subr.mxu0 0.0
    %286 = vmatpush1.msra.mxu0 0.0
    %287 = vmatprep.subr.mxu0 0.0
    %288 = vmatpush1.msra.mxu0 0.0
    %289 = vmatprep.subr.mxu0 0.0
    %290 = vmatpush1.msra.mxu0 0.0
    %291 = vmatprep.subr.mxu0 0.0
    %292 = vmatpush1.msra.mxu0 0.0
    %293 = vmatprep.subr.mxu0 0.0
    %294 = vmatpush1.msra.mxu0 0.0
    %295 = vmatprep.subr.mxu0 0.0
    %296 = vmatpush1.msra.mxu0 0.0
    %297 = vmatprep.subr.mxu0 0.0
    %298 = vmatpush1.msra.mxu0 0.0
    %299 = vmatprep.subr.mxu0 0.0
    %300 = vmatpush1.msra.mxu0 0.0
    %301 = vmatprep.subr.mxu0 0.0
    %302 = vmatpush1.msra.mxu0 0.0
    %303 = vmatprep.subr.mxu0 0.0
    %304 = vmatpush1.msra.mxu0 0.0
    %305 = vmatprep.subr.mxu0 0.0
    %306 = vmatpush1.msra.mxu0 0.0
    %307 = vmatprep.subr.mxu0 0.0
    %308 = vmatpush1.msra.mxu0 0.0
    %309 = vmatprep.subr.mxu0 0.0
    %310 = vmatpush1.msra.mxu0 0.0
    %311 = vmatprep.mubr.f32.mxu0 0.0
    %312 = vmatmul.mubr.f32.gmra.mrb[0].mxu0 %v242
    %v313 = vpop.f32.mrb[0].mxu0
    %v314 = vadd.f32 0.0, %v313
    %v315 = vpop.f32.mrb[0].mxu0
    %316 = vmatprep.mubr.f32.mxu0 0.0
    %317 = vmatmul.mubr.f32.gmra.mrb[0].mxu0 %v245
    %v318 = vpop.f32.mrb[0].mxu0
    %v319 = vadd.f32 0.0, %v318
    %v320 = vpop.f32.mrb[0].mxu0
    %321 = vdwg.mxu0
    %v322 = vlaneseq
    %v323 = vshrl.u32 %v322, 7
    %v324 = vsub.s32 0, %v323
    %v325 = vrot.slane %v64, %v324
    %326 = vmatprep.subr.mxu0 0.0
    %327 = vmatpush1.msra.mxu0 %v314
    %328 = vmatprep.subr.mxu0 0.0
    %329 = vmatpush1.msra.mxu0 %v319
    %330 = vmatprep.subr.mxu0 0.0
    %331 = vmatpush1.msra.mxu0 0.0
    %332 = vmatprep.subr.mxu0 0.0
    %333 = vmatpush1.msra.mxu0 0.0
    %334 = vmatprep.subr.mxu0 0.0
    %335 = vmatpush1.msra.mxu0 0.0
    %336 = vmatprep.subr.mxu0 0.0
    %337 = vmatpush1.msra.mxu0 0.0
    %338 = vmatprep.subr.mxu0 0.0
    %339 = vmatpush1.msra.mxu0 0.0
    %340 = vmatprep.subr.mxu0 0.0
    %341 = vmatpush1.msra.mxu0 0.0
    %342 = vmatprep.subr.mxu0 0.0
    %343 = vmatpush1.msra.mxu0 0.0
    %344 = vmatprep.subr.mxu0 0.0
    %345 = vmatpush1.msra.mxu0 0.0
    %346 = vmatprep.subr.mxu0 0.0
    %347 = vmatpush1.msra.mxu0 0.0
    %348 = vmatprep.subr.mxu0 0.0
    %349 = vmatpush1.msra.mxu0 0.0
    %350 = vmatprep.subr.mxu0 0.0
    %351 = vmatpush1.msra.mxu0 0.0
    %352 = vmatprep.subr.mxu0 0.0
    %353 = vmatpush1.msra.mxu0 0.0
    %354 = vmatprep.subr.mxu0 0.0
    %355 = vmatpush1.msra.mxu0 0.0
    %356 = vmatprep.subr.mxu0 0.0
    %357 = vmatpush1.msra.mxu0 0.0
    %358 = vmatprep.subr.mxu0 0.0
    %359 = vmatpush1.msra.mxu0 0.0
    %360 = vmatprep.subr.mxu0 0.0
    %361 = vmatpush1.msra.mxu0 0.0
    %362 = vmatprep.subr.mxu0 0.0
    %363 = vmatpush1.msra.mxu0 0.0
    %364 = vmatprep.subr.mxu0 0.0
    %365 = vmatpush1.msra.mxu0 0.0
    %366 = vmatprep.subr.mxu0 0.0
    %367 = vmatpush1.msra.mxu0 0.0
    %368 = vmatprep.subr.mxu0 0.0
    %369 = vmatpush1.msra.mxu0 0.0
    %370 = vmatprep.subr.mxu0 0.0
    %371 = vmatpush1.msra.mxu0 0.0
    %372 = vmatprep.subr.mxu0 0.0
    %373 = vmatpush1.msra.mxu0 0.0
    %374 = vmatprep.subr.mxu0 0.0
    %375 = vmatpush1.msra.mxu0 0.0
    %376 = vmatprep.subr.mxu0 0.0
    %377 = vmatpush1.msra.mxu0 0.0
    %378 = vmatprep.subr.mxu0 0.0
    %379 = vmatpush1.msra.mxu0 0.0
    %380 = vmatprep.subr.mxu0 0.0
    %381 = vmatpush1.msra.mxu0 0.0
    %382 = vmatprep.subr.mxu0 0.0
    %383 = vmatpush1.msra.mxu0 0.0
    %384 = vmatprep.subr.mxu0 0.0
    %385 = vmatpush1.msra.mxu0 0.0
    %386 = vmatprep.subr.mxu0 0.0
    %387 = vmatpush1.msra.mxu0 0.0
    %388 = vmatprep.subr.mxu0 0.0
    %389 = vmatpush1.msra.mxu0 0.0
    %390 = vmatprep.mubr.f32.mxu0 0.0
    %391 = vmatmul.mubr.f32.gmra.mrb[0].mxu0 %v72
    %v392 = vpop.f32.mrb[0].mxu0
    %v393 = vadd.f32 %v325, %v392
    %v394 = vpop.f32.mrb[0].mxu0
    %395 = vmatprep.mubr.f32.mxu0 0.0
    %396 = vmatmul.mubr.f32.gmra.mrb[0].mxu0 %v75
    %v397 = vpop.f32.mrb[0].mxu0
    %v398 = vadd.f32 %v325, %v397
    %v399 = vpop.f32.mrb[0].mxu0
    %400 = vdwg.mxu0
    %v401 = vmax.f32 %v393, 0.0
    %v402 = vmax.f32 %v398, 0.0
    %v403 = vld [vmem:[#allocation5] sm:$0xff]
    %v405 = vsel %vm70, %v403, 0
    %407 = vmatprep.subr.mxu0 0.0
    %408 = vmatpush1.msra.mxu0 %v401
    %409 = vmatprep.subr.mxu0 0.0
    %410 = vmatpush1.msra.mxu0 %v402
    %411 = vmatprep.subr.mxu0 0.0
    %412 = vmatpush1.msra.mxu0 0.0
    %413 = vmatprep.subr.mxu0 0.0
    %414 = vmatpush1.msra.mxu0 0.0
    %415 = vmatprep.subr.mxu0 0.0
    %416 = vmatpush1.msra.mxu0 0.0
    %417 = vmatprep.subr.mxu0 0.0
    %418 = vmatpush1.msra.mxu0 0.0
    %419 = vmatprep.subr.mxu0 0.0
    %420 = vmatpush1.msra.mxu0 0.0
    %421 = vmatprep.subr.mxu0 0.0
    %422 = vmatpush1.msra.mxu0 0.0
    %423 = vmatprep.subr.mxu0 0.0
    %424 = vmatpush1.msra.mxu0 0.0
    %425 = vmatprep.subr.mxu0 0.0
    %426 = vmatpush1.msra.mxu0 0.0
    %427 = vmatprep.subr.mxu0 0.0
    %428 = vmatpush1.msra.mxu0 0.0
    %429 = vmatprep.subr.mxu0 0.0
    %430 = vmatpush1.msra.mxu0 0.0
    %431 = vmatprep.subr.mxu0 0.0
    %432 = vmatpush1.msra.mxu0 0.0
    %433 = vmatprep.subr.mxu0 0.0
    %434 = vmatpush1.msra.mxu0 0.0
    %435 = vmatprep.subr.mxu0 0.0
    %436 = vmatpush1.msra.mxu0 0.0
    %437 = vmatprep.subr.mxu0 0.0
    %438 = vmatpush1.msra.mxu0 0.0
    %439 = vmatprep.subr.mxu0 0.0
    %440 = vmatpush1.msra.mxu0 0.0
    %441 = vmatprep.subr.mxu0 0.0
    %442 = vmatpush1.msra.mxu0 0.0
    %443 = vmatprep.subr.mxu0 0.0
    %444 = vmatpush1.msra.mxu0 0.0
    %445 = vmatprep.subr.mxu0 0.0
    %446 = vmatpush1.msra.mxu0 0.0
    %447 = vmatprep.subr.mxu0 0.0
    %448 = vmatpush1.msra.mxu0 0.0
    %449 = vmatprep.subr.mxu0 0.0
    %450 = vmatpush1.msra.mxu0 0.0
    %451 = vmatprep.subr.mxu0 0.0
    %452 = vmatpush1.msra.mxu0 0.0
    %453 = vmatprep.subr.mxu0 0.0
    %454 = vmatpush1.msra.mxu0 0.0
    %455 = vmatprep.subr.mxu0 0.0
    %456 = vmatpush1.msra.mxu0 0.0
    %457 = vmatprep.subr.mxu0 0.0
    %458 = vmatpush1.msra.mxu0 0.0
    %459 = vmatprep.subr.mxu0 0.0
    %460 = vmatpush1.msra.mxu0 0.0
    %461 = vmatprep.subr.mxu0 0.0
    %462 = vmatpush1.msra.mxu0 0.0
    %463 = vmatprep.subr.mxu0 0.0
    %464 = vmatpush1.msra.mxu0 0.0
    %465 = vmatprep.subr.mxu0 0.0
    %466 = vmatpush1.msra.mxu0 0.0
    %467 = vmatprep.subr.mxu0 0.0
    %468 = vmatpush1.msra.mxu0 0.0
    %469 = vmatprep.subr.mxu0 0.0
    %470 = vmatpush1.msra.mxu0 0.0
    %471 = vmatprep.mubr.f32.mxu0 0.0
    %472 = vmatmul.mubr.f32.gmra.mrb[0].mxu0 %v405
    %v473 = vpop.f32.mrb[0].mxu0
    %v474 = vadd.f32 0.0, %v473
    %v475 = vpop.f32.mrb[0].mxu0
    %476 = vdwg.mxu0
    %v477 = vlaneseq
    %v478 = vshrl.u32 %v477, 7
    %v479 = vsub.s32 0, %v478
    %v480 = vrot.slane %v69, %v479
    %v482 = vsel %vm240, %v474, 0
    %484 = vmatprep.subr.mxu0 0.0
    %485 = vmatpush1.msra.mxu0 %v65
    %486 = vmatprep.subr.mxu0 0.0
    %487 = vmatpush1.msra.mxu0 %v66
    %488 = vmatprep.subr.mxu0 0.0
    %489 = vmatpush1.msra.mxu0 %v67
    %490 = vmatprep.subr.mxu0 0.0
    %491 = vmatpush1.msra.mxu0 %v68
    %492 = vmatprep.subr.mxu0 0.0
    %493 = vmatpush1.msra.mxu0 0.0
    %494 = vmatprep.subr.mxu0 0.0
    %495 = vmatpush1.msra.mxu0 0.0
    %496 = vmatprep.subr.mxu0 0.0
    %497 = vmatpush1.msra.mxu0 0.0
    %498 = vmatprep.subr.mxu0 0.0
    %499 = vmatpush1.msra.mxu0 0.0
    %500 = vmatprep.subr.mxu0 0.0
    %501 = vmatpush1.msra.mxu0 0.0
    %502 = vmatprep.subr.mxu0 0.0
    %503 = vmatpush1.msra.mxu0 0.0
    %504 = vmatprep.subr.mxu0 0.0
    %505 = vmatpush1.msra.mxu0 0.0
    %506 = vmatprep.subr.mxu0 0.0
    %507 = vmatpush1.msra.mxu0 0.0
    %508 = vmatprep.subr.mxu0 0.0
    %509 = vmatpush1.msra.mxu0 0.0
    %510 = vmatprep.subr.mxu0 0.0
    %511 = vmatpush1.msra.mxu0 0.0
    %512 = vmatprep.subr.mxu0 0.0
    %513 = vmatpush1.msra.mxu0 0.0
    %514 = vmatprep.subr.mxu0 0.0
    %515 = vmatpush1.msra.mxu0 0.0
    %516 = vmatprep.subr.mxu0 0.0
    %517 = vmatpush1.msra.mxu0 0.0
    %518 = vmatprep.subr.mxu0 0.0
    %519 = vmatpush1.msra.mxu0 0.0
    %520 = vmatprep.subr.mxu0 0.0
    %521 = vmatpush1.msra.mxu0 0.0
    %522 = vmatprep.subr.mxu0 0.0
    %523 = vmatpush1.msra.mxu0 0.0
    %524 = vmatprep.subr.mxu0 0.0
    %525 = vmatpush1.msra.mxu0 0.0
    %526 = vmatprep.subr.mxu0 0.0
    %527 = vmatpush1.msra.mxu0 0.0
    %528 = vmatprep.subr.mxu0 0.0
    %529 = vmatpush1.msra.mxu0 0.0
    %530 = vmatprep.subr.mxu0 0.0
    %531 = vmatpush1.msra.mxu0 0.0
    %532 = vmatprep.subr.mxu0 0.0
    %533 = vmatpush1.msra.mxu0 0.0
    %534 = vmatprep.subr.mxu0 0.0
    %535 = vmatpush1.msra.mxu0 0.0
    %536 = vmatprep.subr.mxu0 0.0
    %537 = vmatpush1.msra.mxu0 0.0
    %538 = vmatprep.subr.mxu0 0.0
    %539 = vmatpush1.msra.mxu0 0.0
    %540 = vmatprep.subr.mxu0 0.0
    %541 = vmatpush1.msra.mxu0 0.0
    %542 = vmatprep.subr.mxu0 0.0
    %543 = vmatpush1.msra.mxu0 0.0
    %544 = vmatprep.subr.mxu0 0.0
    %545 = vmatpush1.msra.mxu0 0.0
    %546 = vmatprep.subr.mxu0 0.0
    %547 = vmatpush1.msra.mxu0 0.0
    %548 = vmatprep.mubr.f32.mxu0 0.0
    %549 = vmatmul.mubr.f32.gmra.mrb[0].mxu0 %v482
    %v550 = vpop.f32.mrb[0].mxu0
    %v551 = vadd.f32 %v480, %v550
    %v552 = vpop.f32.mrb[0].mxu0
    %553 = vdwg.mxu0
    %554 = vst [vmem:[#allocation8] sm:$0xff] %v551
    // Predicated region
    $region26: #{tpu_custom_call.1} parent=1 // pred_check
      _
    $region27: #{tpu_custom_call.1} parent=1 // pred_check_branch
      %556 = sbr.rel (0) target = $region29
    $region28: #{tpu_custom_call.1} parent=1 // pred_region
      %s558 = ssub.s32 128, 128
      %559 = vsyncadd [#allocation4], %s558
      %s561 = sshll.u32 [#allocation8], 4
      %s562 = int_to_ptr.vmem [resolvable:$true] %s561
      %564 = dma.vmem_to_hbm [thread:$0]  %s562, 128, %s3, [#allocation4]
    $region29: #{tpu_custom_call.1} parent=1 // pred_fallthru
      _
    // Predicated region
    $region30: #{tpu_custom_call.1} parent=1 // pred_check
      _
    $region31: #{tpu_custom_call.1} parent=1 // pred_check_branch
      %566 = sbr.rel (0) target = $region33
    $region32: #{tpu_custom_call.1} parent=1 // pred_region
      %567 = dma.done [#allocation4], 128
    $region33: #{tpu_custom_call.1} parent=1 // pred_fallthru
      _
    %568 = vsyncpa [#allocation3], 1
    %569 = vsyncpa [#allocation6], 1
    %570 = vsyncpa [#allocation4], 1

</llo_original>
